<compile_context>
chip_gen: v5e
topology: v5e:2x2
jax: 0.10.0
libtpu: 0.0.40
codegen_flags: <defaults>
</compile_context>

<pallas_src>
import functools

import jax
import jax.numpy as jnp
from jax.experimental import pallas as pl
from jax.experimental.pallas import tpu as pltpu

BN_EPS = 1e-5
_VMEM_LIMIT = 32 * 1024 * 1024  # safe ceiling on v5e/v6e/v7x; working set is far below


def _round_up(x, m):
    return (x + m - 1) // m * m


def _pick_tm(m):
    # Big enough to reach ~85% of HBM roofline, small enough that the
    # double-buffered (x, h) tiles + weights fit default scoped VMEM on
    # every generation (including v7x's 64 MiB physical VMEM).
    return min(512, _round_up(m, 8))


def _cparams():
    return pltpu.CompilerParams(
        dimension_semantics=("parallel",),  # shard M tiles across TCs (v7x megacore)
        vmem_limit_bytes=_VMEM_LIMIT,
    )


# ---------------------------------------------------------------------------
# Kernels
# ---------------------------------------------------------------------------
def _linear_stats_kernel(x_ref, w_ref, b_ref, h_ref, sum_ref, sq_ref,
                         *, tm, m_true, need_mask):
    # x: (TM, Fin) bf16, w: (Fin, Fout) bf16, b: (1, Fout) f32
    # h: (TM, Fout) f32, sum/sq: (1, 1, Fout) f32 per-tile partial stats
    h = jnp.dot(x_ref[...], w_ref[...],
                preferred_element_type=jnp.float32) + b_ref[...]
    h_ref[...] = h
    if need_mask:
        # Exclude padded rows (beyond the true M) from the BN statistics.
        row = jax.lax.broadcasted_iota(jnp.int32, h.shape, 0) + pl.program_id(0) * tm
        hm = jnp.where(row < m_true, h, 0.0)
    else:
        hm = h
    s = jnp.sum(hm, axis=0, keepdims=True)          # (1, Fout)
    ss = jnp.sum(hm * hm, axis=0, keepdims=True)    # (1, Fout)  (one-pass variance)
    sum_ref[...] = s[None]
    sq_ref[...] = ss[None]


def _bn_relu_kernel(h_ref, scale_ref, shift_ref, o_ref):
    # BN apply (f32) + ReLU, emit bf16 activations for the next layer's matmul.
    a = jnp.maximum(h_ref[...] * scale_ref[...] + shift_ref[...], 0.0)
    o_ref[...] = a.astype(o_ref.dtype)


def _bn_relu_final_kernel(h_ref, scale_ref, shift_ref, wl_ref, bl_ref, o_ref):
    # BN apply + ReLU fused with the final Linear(Fout -> 1) matvec.
    a = jnp.maximum(h_ref[...] * scale_ref[...] + shift_ref[...], 0.0)
    out = jnp.dot(a.astype(jnp.bfloat16), wl_ref[...],
                  preferred_element_type=jnp.float32) + bl_ref[...]
    o_ref[...] = out


def _linear_final_kernel(x_ref, w_ref, b_ref, o_ref):
    # layer_num == 1 path: plain Linear(in -> 1).
    out = jnp.dot(x_ref[...], w_ref[...],
                  preferred_element_type=jnp.float32) + b_ref[...]
    o_ref[...] = out


# ---------------------------------------------------------------------------
# pallas_call wrappers
# ---------------------------------------------------------------------------
def _call_linear_stats(x_bf16, w_bf16, b_f32, m_true, tm):
    m_pad, fin = x_bf16.shape
    fout = w_bf16.shape[1]
    nt = m_pad // tm
    kernel = functools.partial(_linear_stats_kernel, tm=tm, m_true=m_true,
                               need_mask=(m_pad != m_true))
    cost = pl.CostEstimate(
        flops=2 * m_pad * fin * fout + 4 * m_pad * fout,
        transcendentals=0,
        bytes_accessed=(m_pad * fin * 2 + fin * fout * 2 + fout * 4
                        + m_pad * fout * 4 + 2 * nt * fout * 4),
    )
    return pl.pallas_call(
        kernel,
        out_shape=(jax.ShapeDtypeStruct((m_pad, fout), jnp.float32),
                   jax.ShapeDtypeStruct((nt, 1, fout), jnp.float32),
                   jax.ShapeDtypeStruct((nt, 1, fout), jnp.float32)),
        grid=(nt,),
        in_specs=[pl.BlockSpec((tm, fin), lambda i: (i, 0)),
                  pl.BlockSpec((fin, fout), lambda i: (0, 0)),
                  pl.BlockSpec((1, fout), lambda i: (0, 0))],
        out_specs=(pl.BlockSpec((tm, fout), lambda i: (i, 0)),
                   pl.BlockSpec((1, 1, fout), lambda i: (i, 0, 0)),
                   pl.BlockSpec((1, 1, fout), lambda i: (i, 0, 0))),
        compiler_params=_cparams(),
        cost_estimate=cost,
    )(x_bf16, w_bf16, b_f32)


def _call_bn_relu(h, scale, shift, tm):
    m_pad, fout = h.shape
    nt = m_pad // tm
    cost = pl.CostEstimate(
        flops=3 * m_pad * fout, transcendentals=0,
        bytes_accessed=m_pad * fout * 4 + 2 * fout * 4 + m_pad * fout * 2,
    )
    return pl.pallas_call(
        _bn_relu_kernel,
        out_shape=jax.ShapeDtypeStruct((m_pad, fout), jnp.bfloat16),
        grid=(nt,),
        in_specs=[pl.BlockSpec((tm, fout), lambda i: (i, 0)),
                  pl.BlockSpec((1, fout), lambda i: (0, 0)),
                  pl.BlockSpec((1, fout), lambda i: (0, 0))],
        out_specs=pl.BlockSpec((tm, fout), lambda i: (i, 0)),
        compiler_params=_cparams(),
        cost_estimate=cost,
    )(h, scale, shift)


def _call_bn_relu_final(h, scale, shift, w_last_bf16, b_last_f32, tm):
    m_pad, fout = h.shape
    nt = m_pad // tm
    cost = pl.CostEstimate(
        flops=5 * m_pad * fout, transcendentals=0,
        bytes_accessed=m_pad * fout * 4 + 2 * fout * 4 + fout * 2 + m_pad * 4,
    )
    return pl.pallas_call(
        _bn_relu_final_kernel,
        out_shape=jax.ShapeDtypeStruct((m_pad, 1), jnp.float32),
        grid=(nt,),
        in_specs=[pl.BlockSpec((tm, fout), lambda i: (i, 0)),
                  pl.BlockSpec((1, fout), lambda i: (0, 0)),
                  pl.BlockSpec((1, fout), lambda i: (0, 0)),
                  pl.BlockSpec((fout, 1), lambda i: (0, 0)),
                  pl.BlockSpec((1, 1), lambda i: (0, 0))],
        out_specs=pl.BlockSpec((tm, 1), lambda i: (i, 0)),
        compiler_params=_cparams(),
        cost_estimate=cost,
    )(h, scale, shift, w_last_bf16, b_last_f32)


def _call_linear_final(x_bf16, w_bf16, b_f32, tm):
    m_pad, fin = x_bf16.shape
    nt = m_pad // tm
    cost = pl.CostEstimate(
        flops=2 * m_pad * fin, transcendentals=0,
        bytes_accessed=m_pad * fin * 2 + fin * 2 + 4 + m_pad * 4,
    )
    return pl.pallas_call(
        _linear_final_kernel,
        out_shape=jax.ShapeDtypeStruct((m_pad, 1), jnp.float32),
        grid=(nt,),
        in_specs=[pl.BlockSpec((tm, fin), lambda i: (i, 0)),
                  pl.BlockSpec((fin, 1), lambda i: (0, 0)),
                  pl.BlockSpec((1, 1), lambda i: (0, 0))],
        out_specs=pl.BlockSpec((tm, 1), lambda i: (i, 0)),
        compiler_params=_cparams(),
        cost_estimate=cost,
    )(x_bf16, w_bf16, b_f32)


# ---------------------------------------------------------------------------
# Parameter construction (mimics PyTorch default Linear / BatchNorm1d init)
# ---------------------------------------------------------------------------
def init_outlayer_params(key, in_num, layer_num, inter_num=512):
    params = []
    for i in range(layer_num):
        if i == layer_num - 1:
            fan_in = in_num if layer_num == 1 else inter_num
            fan_out = 1
        else:
            fan_in = in_num if i == 0 else inter_num
            fan_out = inter_num
        key, kw, kb = jax.random.split(key, 3)
        bound = 1.0 / (fan_in ** 0.5)
        w = jax.random.uniform(kw, (fan_in, fan_out), jnp.float32, -bound, bound)
        b = jax.random.uniform(kb, (1, fan_out), jnp.float32, -bound, bound)
        layer = {"w": w, "b": b}
        if i != layer_num - 1:
            layer["gamma"] = jnp.ones((1, fan_out), jnp.float32)
            layer["beta"] = jnp.zeros((1, fan_out), jnp.float32)
        params.append(layer)
    return params


# ---------------------------------------------------------------------------
# Forward (tiny stats glue in JAX, hot path in Pallas)
# ---------------------------------------------------------------------------
def _bn_scale_shift(sums, sqs, gamma, beta, m_true):
    col_sum = jnp.sum(sums[:, 0, :], axis=0)       # (Fout,)
    col_sq = jnp.sum(sqs[:, 0, :], axis=0)         # (Fout,)
    inv_m = 1.0 / float(m_true)
    mean = col_sum * inv_m
    var = jnp.maximum(col_sq * inv_m - mean * mean, 0.0)   # biased (training-mode) var
    inv_std = jax.lax.rsqrt(var + BN_EPS)
    scale = gamma[0] * inv_std
    shift = beta[0] - mean * scale
    return scale[None, :], shift[None, :]          # (1, Fout) each, f32


@jax.jit
def outlayer_forward(x, params):
    # x: (B, N, in_num) -> (B, N, 1)
    b, n, f = x.shape
    m = b * n
    tm = _pick_tm(m)
    m_pad = _round_up(m, tm)

    x2d = x.reshape(m, f).astype(jnp.float32)
    if m_pad != m:
        x2d = jnp.pad(x2d, ((0, m_pad - m), (0, 0)))
    act = x2d.astype(jnp.bfloat16)

    n_layers = len(params)
    if n_layers == 1:
        p = params[0]
        out = _call_linear_final(act, p["w"].astype(jnp.bfloat16), p["b"], tm)
    else:
        out = None
        for i in range(n_layers - 1):
            p = params[i]
            h, sums, sqs = _call_linear_stats(
                act, p["w"].astype(jnp.bfloat16), p["b"], m, tm)
            scale, shift = _bn_scale_shift(sums, sqs, p["gamma"], p["beta"], m)
            if i == n_layers - 2:
                pf = params[-1]
                out = _call_bn_relu_final(h, scale, shift,
                                          pf["w"].astype(jnp.bfloat16), pf["b"], tm)
            else:
                act = _call_bn_relu(h, scale, shift, tm)
    return out[:m].reshape(b, n, 1)


# Pure-JAX f32 reference for sanity checking
def outlayer_reference(x, params):
    b, n, f = x.shape
    out = x.reshape(b * n, f).astype(jnp.float32)
    n_layers = len(params)
    for i, p in enumerate(params):
        out = out @ p["w"] + p["b"]
        if i != n_layers - 1:
            mean = jnp.mean(out, axis=0, keepdims=True)
            var = jnp.mean((out - mean) ** 2, axis=0, keepdims=True)
            out = (out - mean) * jax.lax.rsqrt(var + BN_EPS)
            out = out * p["gamma"] + p["beta"]
            out = jnp.maximum(out, 0.0)
    return out.reshape(b, n, 1)


if __name__ == "__main__":
    # Small shapes consistent with the module: x is (batch, node_num, in_num).
    # node_num=9 -> M=18 exercises the row-padding / stats-masking path;
    # layer_num=3 exercises both the intermediate BN+ReLU kernel and the
    # fused BN+ReLU+final-Linear kernel.
    batch, node_num, in_num = 2, 9, 32
    layer_num, inter_num = 3, 64

    key = jax.random.PRNGKey(0)
    kx, kp = jax.random.split(key)
    x = jax.random.normal(kx, (batch, node_num, in_num), jnp.float32)
    params = init_outlayer_params(kp, in_num, layer_num, inter_num)

    out = jax.block_until_ready(outlayer_forward(x, params))
    ref = outlayer_reference(x, params)

    assert out.shape == (batch, node_num, 1)
    # bf16 MXU operands / bf16 inter-layer activations (f32 accumulation and
    # f32 BN math) -> slightly looser tolerance than a pure-f32 pipeline.
    max_err = jnp.max(jnp.abs(out - ref))
    assert jnp.allclose(out, ref, atol=3e-2, rtol=3e-2), f"mismatch vs reference: {max_err}"

    print("KERNEL_OK")
</pallas_src>

<mosaic_0001>
module attributes {stable_mosaic.version = 11 : i64} {
  func.func @_bn_relu_kernel(%arg0: i32, %arg1: memref<24x64xf32, #tpu.memory_space<vmem>>, %arg2: memref<1x64xf32, #tpu.memory_space<vmem>>, %arg3: memref<1x64xf32, #tpu.memory_space<vmem>>, %arg4: memref<24x64xbf16, #tpu.memory_space<vmem>>) attributes {dimension_semantics = [#tpu.dimension_semantics<parallel>], iteration_bounds = array<i64: 1>, scalar_prefetch = 0 : i64, scratch_operands = 0 : i64, tpu.core_type = #tpu.core_type<tc>, window_params = [{transform_indices = @transform_0, window_bounds = array<i64: 24, 64>}, {pipeline_mode = #tpu.pipeline_mode<synchronous>, transform_indices = @transform_1, window_bounds = array<i64: 1, 64>}, {pipeline_mode = #tpu.pipeline_mode<synchronous>, transform_indices = @transform_2, window_bounds = array<i64: 1, 64>}, {transform_indices = @transform_3, window_bounds = array<i64: 24, 64>}]} {
    %c0 = arith.constant 0 : index
    %c0_0 = arith.constant 0 : index
    %0 = vector.load %arg1[%c0, %c0_0] : memref<24x64xf32, #tpu.memory_space<vmem>>, vector<24x64xf32>
    %c0_1 = arith.constant 0 : index
    %c0_2 = arith.constant 0 : index
    %1 = vector.load %arg2[%c0_1, %c0_2] : memref<1x64xf32, #tpu.memory_space<vmem>>, vector<1x64xf32>
    %2 = vector.broadcast %1 : vector<1x64xf32> to vector<24x64xf32>
    %3 = arith.mulf %0, %2 : vector<24x64xf32>
    %c0_3 = arith.constant 0 : index
    %c0_4 = arith.constant 0 : index
    %4 = vector.load %arg3[%c0_3, %c0_4] : memref<1x64xf32, #tpu.memory_space<vmem>>, vector<1x64xf32>
    %5 = vector.broadcast %4 : vector<1x64xf32> to vector<24x64xf32>
    %6 = arith.addf %3, %5 : vector<24x64xf32>
    %cst = arith.constant 0.000000e+00 : f32
    %7 = vector.broadcast %cst : f32 to vector<24x64xf32>
    %8 = arith.maximumf %6, %7 : vector<24x64xf32>
    %9 = arith.truncf %8 : vector<24x64xf32> to vector<24x64xbf16>
    %c0_5 = arith.constant 0 : index
    %c0_6 = arith.constant 0 : index
    %10 = vector.load %arg4[%c0_5, %c0_6] : memref<24x64xbf16, #tpu.memory_space<vmem>>, vector<24x64xbf16>
    tpu.vector_store %arg4[%c0_5, %c0_6], %9 {strides = array<i32>} : memref<24x64xbf16, #tpu.memory_space<vmem>>, vector<24x64xbf16>,
    return
  }
  func.func @transform_0(%arg0: i32) -> (i32, i32) {
    %c0_i32 = arith.constant 0 : i32
    %c0_i32_0 = arith.constant 0 : i32
    return %arg0, %c0_i32 : i32, i32
  }
  func.func @transform_1(%arg0: i32) -> (i32, i32) {
    %c0_i32 = arith.constant 0 : i32
    %c0_i32_0 = arith.constant 0 : i32
    %c0_i32_1 = arith.constant 0 : i32
    return %c0_i32, %c0_i32_0 : i32, i32
  }
  func.func @transform_2(%arg0: i32) -> (i32, i32) {
    %c0_i32 = arith.constant 0 : i32
    %c0_i32_0 = arith.constant 0 : i32
    %c0_i32_1 = arith.constant 0 : i32
    return %c0_i32, %c0_i32_0 : i32, i32
  }
  func.func @transform_3(%arg0: i32) -> (i32, i32) {
    %c0_i32 = arith.constant 0 : i32
    %c0_i32_0 = arith.constant 0 : i32
    return %arg0, %c0_i32 : i32, i32
  }
}

module attributes {stable_mosaic.version = 11 : i64} {
  func.func @_linear_stats_kernel(%arg0: i32, %arg1: memref<24x32xbf16, #tpu.memory_space<vmem>>, %arg2: memref<32x64xbf16, #tpu.memory_space<vmem>>, %arg3: memref<1x64xf32, #tpu.memory_space<vmem>>, %arg4: memref<24x64xf32, #tpu.memory_space<vmem>>, %arg5: memref<1x1x64xf32, #tpu.memory_space<vmem>>, %arg6: memref<1x1x64xf32, #tpu.memory_space<vmem>>) attributes {dimension_semantics = [#tpu.dimension_semantics<parallel>], iteration_bounds = array<i64: 1>, scalar_prefetch = 0 : i64, scratch_operands = 0 : i64, tpu.core_type = #tpu.core_type<tc>, window_params = [{transform_indices = @transform_0, window_bounds = array<i64: 24, 32>}, {pipeline_mode = #tpu.pipeline_mode<synchronous>, transform_indices = @transform_1, window_bounds = array<i64: 32, 64>}, {pipeline_mode = #tpu.pipeline_mode<synchronous>, transform_indices = @transform_2, window_bounds = array<i64: 1, 64>}, {transform_indices = @transform_3, window_bounds = array<i64: 24, 64>}, {transform_indices = @transform_4, window_bounds = array<i64: 1, 1, 64>}, {transform_indices = @transform_5, window_bounds = array<i64: 1, 1, 64>}]} {
    %c0 = arith.constant 0 : index
    %c0_0 = arith.constant 0 : index
    %0 = vector.load %arg1[%c0, %c0_0] : memref<24x32xbf16, #tpu.memory_space<vmem>>, vector<24x32xbf16>
    %c0_1 = arith.constant 0 : index
    %c0_2 = arith.constant 0 : index
    %1 = vector.load %arg2[%c0_1, %c0_2] : memref<32x64xbf16, #tpu.memory_space<vmem>>, vector<32x64xbf16>
    %cst = arith.constant dense<0.000000e+00> : vector<24x64xf32>
    %2 = tpu.matmul %0, %1, %cst {dimension_numbers = #tpu.dot_dimension_numbers<[1], [0], [0], [1], [0, 0, 1, 1], [], []>} : vector<24x32xbf16>, vector<32x64xbf16>, vector<24x64xf32> -> vector<24x64xf32>
    %c0_3 = arith.constant 0 : index
    %c0_4 = arith.constant 0 : index
    %3 = vector.load %arg3[%c0_3, %c0_4] : memref<1x64xf32, #tpu.memory_space<vmem>>, vector<1x64xf32>
    %4 = vector.broadcast %3 : vector<1x64xf32> to vector<24x64xf32>
    %5 = arith.addf %2, %4 : vector<24x64xf32>
    %c0_5 = arith.constant 0 : index
    %c0_6 = arith.constant 0 : index
    %6 = vector.load %arg4[%c0_5, %c0_6] : memref<24x64xf32, #tpu.memory_space<vmem>>, vector<24x64xf32>
    tpu.vector_store %arg4[%c0_5, %c0_6], %5 {strides = array<i32>} : memref<24x64xf32, #tpu.memory_space<vmem>>, vector<24x64xf32>,
    %7 = tpu.iota {dimensions = array<i32: 0>} : vector<24x64xi32>
    %c24_i32 = arith.constant 24 : i32
    %8 = arith.muli %arg0, %c24_i32 : i32
    %9 = vector.broadcast %8 : i32 to vector<24x64xi32>
    %10 = arith.addi %7, %9 : vector<24x64xi32>
    %c18_i32 = arith.constant 18 : i32
    %11 = vector.broadcast %c18_i32 : i32 to vector<24x64xi32>
    %12 = arith.cmpi slt, %10, %11 : vector<24x64xi32>
    %cst_7 = arith.constant 0.000000e+00 : f32
    %13 = vector.broadcast %cst_7 : f32 to vector<24x64xf32>
    %14 = arith.select %12, %5, %13 : vector<24x64xi1>, vector<24x64xf32>
    %cst_8 = arith.constant dense<0.000000e+00> : vector<64xf32>
    %15 = vector.multi_reduction <add>, %14, %cst_8 [0] : vector<24x64xf32> to vector<64xf32>
    %16 = vector.shape_cast %15 : vector<64xf32> to vector<1x64xf32>
    %17 = arith.mulf %14, %14 : vector<24x64xf32>
    %cst_9 = arith.constant dense<0.000000e+00> : vector<64xf32>
    %18 = vector.multi_reduction <add>, %17, %cst_9 [0] : vector<24x64xf32> to vector<64xf32>
    %19 = vector.shape_cast %18 : vector<64xf32> to vector<1x64xf32>
    %20 = vector.shape_cast %16 : vector<1x64xf32> to vector<1x1x64xf32>
    %c0_10 = arith.constant 0 : index
    %c0_11 = arith.constant 0 : index
    %c0_12 = arith.constant 0 : index
    %21 = vector.load %arg5[%c0_10, %c0_11, %c0_12] : memref<1x1x64xf32, #tpu.memory_space<vmem>>, vector<1x1x64xf32>
    tpu.vector_store %arg5[%c0_10, %c0_11, %c0_12], %20 {strides = array<i32>} : memref<1x1x64xf32, #tpu.memory_space<vmem>>, vector<1x1x64xf32>,
    %22 = vector.shape_cast %19 : vector<1x64xf32> to vector<1x1x64xf32>
    %c0_13 = arith.constant 0 : index
    %c0_14 = arith.constant 0 : index
    %c0_15 = arith.constant 0 : index
    %23 = vector.load %arg6[%c0_13, %c0_14, %c0_15] : memref<1x1x64xf32, #tpu.memory_space<vmem>>, vector<1x1x64xf32>
    tpu.vector_store %arg6[%c0_13, %c0_14, %c0_15], %22 {strides = array<i32>} : memref<1x1x64xf32, #tpu.memory_space<vmem>>, vector<1x1x64xf32>,
    return
  }
  func.func @transform_0(%arg0: i32) -> (i32, i32) {
    %c0_i32 = arith.constant 0 : i32
    %c0_i32_0 = arith.constant 0 : i32
    return %arg0, %c0_i32 : i32, i32
  }
  func.func @transform_1(%arg0: i32) -> (i32, i32) {
    %c0_i32 = arith.constant 0 : i32
    %c0_i32_0 = arith.constant 0 : i32
    %c0_i32_1 = arith.constant 0 : i32
    return %c0_i32, %c0_i32_0 : i32, i32
  }
  func.func @transform_2(%arg0: i32) -> (i32, i32) {
    %c0_i32 = arith.constant 0 : i32
    %c0_i32_0 = arith.constant 0 : i32
    %c0_i32_1 = arith.constant 0 : i32
    return %c0_i32, %c0_i32_0 : i32, i32
  }
  func.func @transform_3(%arg0: i32) -> (i32, i32) {
    %c0_i32 = arith.constant 0 : i32
    %c0_i32_0 = arith.constant 0 : i32
    return %arg0, %c0_i32 : i32, i32
  }
  func.func @transform_4(%arg0: i32) -> (i32, i32, i32) {
    %c0_i32 = arith.constant 0 : i32
    %c0_i32_0 = arith.constant 0 : i32
    %c0_i32_1 = arith.constant 0 : i32
    return %arg0, %c0_i32, %c0_i32_0 : i32, i32, i32
  }
  func.func @transform_5(%arg0: i32) -> (i32, i32, i32) {
    %c0_i32 = arith.constant 0 : i32
    %c0_i32_0 = arith.constant 0 : i32
    %c0_i32_1 = arith.constant 0 : i32
    return %arg0, %c0_i32, %c0_i32_0 : i32, i32, i32
  }
}

module attributes {stable_mosaic.version = 11 : i64} {
  func.func @_linear_stats_kernel(%arg0: i32, %arg1: memref<24x64xbf16, #tpu.memory_space<vmem>>, %arg2: memref<64x64xbf16, #tpu.memory_space<vmem>>, %arg3: memref<1x64xf32, #tpu.memory_space<vmem>>, %arg4: memref<24x64xf32, #tpu.memory_space<vmem>>, %arg5: memref<1x1x64xf32, #tpu.memory_space<vmem>>, %arg6: memref<1x1x64xf32, #tpu.memory_space<vmem>>) attributes {dimension_semantics = [#tpu.dimension_semantics<parallel>], iteration_bounds = array<i64: 1>, scalar_prefetch = 0 : i64, scratch_operands = 0 : i64, tpu.core_type = #tpu.core_type<tc>, window_params = [{transform_indices = @transform_0, window_bounds = array<i64: 24, 64>}, {pipeline_mode = #tpu.pipeline_mode<synchronous>, transform_indices = @transform_1, window_bounds = array<i64: 64, 64>}, {pipeline_mode = #tpu.pipeline_mode<synchronous>, transform_indices = @transform_2, window_bounds = array<i64: 1, 64>}, {transform_indices = @transform_3, window_bounds = array<i64: 24, 64>}, {transform_indices = @transform_4, window_bounds = array<i64: 1, 1, 64>}, {transform_indices = @transform_5, window_bounds = array<i64: 1, 1, 64>}]} {
    %c0 = arith.constant 0 : index
    %c0_0 = arith.constant 0 : index
    %0 = vector.load %arg1[%c0, %c0_0] : memref<24x64xbf16, #tpu.memory_space<vmem>>, vector<24x64xbf16>
    %c0_1 = arith.constant 0 : index
    %c0_2 = arith.constant 0 : index
    %1 = vector.load %arg2[%c0_1, %c0_2] : memref<64x64xbf16, #tpu.memory_space<vmem>>, vector<64x64xbf16>
    %cst = arith.constant dense<0.000000e+00> : vector<24x64xf32>
    %2 = tpu.matmul %0, %1, %cst {dimension_numbers = #tpu.dot_dimension_numbers<[1], [0], [0], [1], [0, 0, 1, 1], [], []>} : vector<24x64xbf16>, vector<64x64xbf16>, vector<24x64xf32> -> vector<24x64xf32>
    %c0_3 = arith.constant 0 : index
    %c0_4 = arith.constant 0 : index
    %3 = vector.load %arg3[%c0_3, %c0_4] : memref<1x64xf32, #tpu.memory_space<vmem>>, vector<1x64xf32>
    %4 = vector.broadcast %3 : vector<1x64xf32> to vector<24x64xf32>
    %5 = arith.addf %2, %4 : vector<24x64xf32>
    %c0_5 = arith.constant 0 : index
    %c0_6 = arith.constant 0 : index
    %6 = vector.load %arg4[%c0_5, %c0_6] : memref<24x64xf32, #tpu.memory_space<vmem>>, vector<24x64xf32>
    tpu.vector_store %arg4[%c0_5, %c0_6], %5 {strides = array<i32>} : memref<24x64xf32, #tpu.memory_space<vmem>>, vector<24x64xf32>,
    %7 = tpu.iota {dimensions = array<i32: 0>} : vector<24x64xi32>
    %c24_i32 = arith.constant 24 : i32
    %8 = arith.muli %arg0, %c24_i32 : i32
    %9 = vector.broadcast %8 : i32 to vector<24x64xi32>
    %10 = arith.addi %7, %9 : vector<24x64xi32>
    %c18_i32 = arith.constant 18 : i32
    %11 = vector.broadcast %c18_i32 : i32 to vector<24x64xi32>
    %12 = arith.cmpi slt, %10, %11 : vector<24x64xi32>
    %cst_7 = arith.constant 0.000000e+00 : f32
    %13 = vector.broadcast %cst_7 : f32 to vector<24x64xf32>
    %14 = arith.select %12, %5, %13 : vector<24x64xi1>, vector<24x64xf32>
    %cst_8 = arith.constant dense<0.000000e+00> : vector<64xf32>
    %15 = vector.multi_reduction <add>, %14, %cst_8 [0] : vector<24x64xf32> to vector<64xf32>
    %16 = vector.shape_cast %15 : vector<64xf32> to vector<1x64xf32>
    %17 = arith.mulf %14, %14 : vector<24x64xf32>
    %cst_9 = arith.constant dense<0.000000e+00> : vector<64xf32>
    %18 = vector.multi_reduction <add>, %17, %cst_9 [0] : vector<24x64xf32> to vector<64xf32>
    %19 = vector.shape_cast %18 : vector<64xf32> to vector<1x64xf32>
    %20 = vector.shape_cast %16 : vector<1x64xf32> to vector<1x1x64xf32>
    %c0_10 = arith.constant 0 : index
    %c0_11 = arith.constant 0 : index
    %c0_12 = arith.constant 0 : index
    %21 = vector.load %arg5[%c0_10, %c0_11, %c0_12] : memref<1x1x64xf32, #tpu.memory_space<vmem>>, vector<1x1x64xf32>
    tpu.vector_store %arg5[%c0_10, %c0_11, %c0_12], %20 {strides = array<i32>} : memref<1x1x64xf32, #tpu.memory_space<vmem>>, vector<1x1x64xf32>,
    %22 = vector.shape_cast %19 : vector<1x64xf32> to vector<1x1x64xf32>
    %c0_13 = arith.constant 0 : index
    %c0_14 = arith.constant 0 : index
    %c0_15 = arith.constant 0 : index
    %23 = vector.load %arg6[%c0_13, %c0_14, %c0_15] : memref<1x1x64xf32, #tpu.memory_space<vmem>>, vector<1x1x64xf32>
    tpu.vector_store %arg6[%c0_13, %c0_14, %c0_15], %22 {strides = array<i32>} : memref<1x1x64xf32, #tpu.memory_space<vmem>>, vector<1x1x64xf32>,
    return
  }
  func.func @transform_0(%arg0: i32) -> (i32, i32) {
    %c0_i32 = arith.constant 0 : i32
    %c0_i32_0 = arith.constant 0 : i32
    return %arg0, %c0_i32 : i32, i32
  }
  func.func @transform_1(%arg0: i32) -> (i32, i32) {
    %c0_i32 = arith.constant 0 : i32
    %c0_i32_0 = arith.constant 0 : i32
    %c0_i32_1 = arith.constant 0 : i32
    return %c0_i32, %c0_i32_0 : i32, i32
  }
  func.func @transform_2(%arg0: i32) -> (i32, i32) {
    %c0_i32 = arith.constant 0 : i32
    %c0_i32_0 = arith.constant 0 : i32
    %c0_i32_1 = arith.constant 0 : i32
    return %c0_i32, %c0_i32_0 : i32, i32
  }
  func.func @transform_3(%arg0: i32) -> (i32, i32) {
    %c0_i32 = arith.constant 0 : i32
    %c0_i32_0 = arith.constant 0 : i32
    return %arg0, %c0_i32 : i32, i32
  }
  func.func @transform_4(%arg0: i32) -> (i32, i32, i32) {
    %c0_i32 = arith.constant 0 : i32
    %c0_i32_0 = arith.constant 0 : i32
    %c0_i32_1 = arith.constant 0 : i32
    return %arg0, %c0_i32, %c0_i32_0 : i32, i32, i32
  }
  func.func @transform_5(%arg0: i32) -> (i32, i32, i32) {
    %c0_i32 = arith.constant 0 : i32
    %c0_i32_0 = arith.constant 0 : i32
    %c0_i32_1 = arith.constant 0 : i32
    return %arg0, %c0_i32, %c0_i32_0 : i32, i32, i32
  }
}

module attributes {stable_mosaic.version = 11 : i64} {
  func.func @_bn_relu_final_kernel(%arg0: i32, %arg1: memref<24x64xf32, #tpu.memory_space<vmem>>, %arg2: memref<1x64xf32, #tpu.memory_space<vmem>>, %arg3: memref<1x64xf32, #tpu.memory_space<vmem>>, %arg4: memref<64x1xbf16, #tpu.memory_space<vmem>>, %arg5: memref<1x1xf32, #tpu.memory_space<vmem>>, %arg6: memref<24x1xf32, #tpu.memory_space<vmem>>) attributes {dimension_semantics = [#tpu.dimension_semantics<parallel>], iteration_bounds = array<i64: 1>, scalar_prefetch = 0 : i64, scratch_operands = 0 : i64, tpu.core_type = #tpu.core_type<tc>, window_params = [{transform_indices = @transform_0, window_bounds = array<i64: 24, 64>}, {pipeline_mode = #tpu.pipeline_mode<synchronous>, transform_indices = @transform_1, window_bounds = array<i64: 1, 64>}, {pipeline_mode = #tpu.pipeline_mode<synchronous>, transform_indices = @transform_2, window_bounds = array<i64: 1, 64>}, {pipeline_mode = #tpu.pipeline_mode<synchronous>, transform_indices = @transform_3, window_bounds = array<i64: 64, 1>}, {pipeline_mode = #tpu.pipeline_mode<synchronous>, transform_indices = @transform_4, window_bounds = array<i64: 1, 1>}, {transform_indices = @transform_5, window_bounds = array<i64: 24, 1>}]} {
    %c0 = arith.constant 0 : index
    %c0_0 = arith.constant 0 : index
    %0 = vector.load %arg1[%c0, %c0_0] : memref<24x64xf32, #tpu.memory_space<vmem>>, vector<24x64xf32>
    %c0_1 = arith.constant 0 : index
    %c0_2 = arith.constant 0 : index
    %1 = vector.load %arg2[%c0_1, %c0_2] : memref<1x64xf32, #tpu.memory_space<vmem>>, vector<1x64xf32>
    %2 = vector.broadcast %1 : vector<1x64xf32> to vector<24x64xf32>
    %3 = arith.mulf %0, %2 : vector<24x64xf32>
    %c0_3 = arith.constant 0 : index
    %c0_4 = arith.constant 0 : index
    %4 = vector.load %arg3[%c0_3, %c0_4] : memref<1x64xf32, #tpu.memory_space<vmem>>, vector<1x64xf32>
    %5 = vector.broadcast %4 : vector<1x64xf32> to vector<24x64xf32>
    %6 = arith.addf %3, %5 : vector<24x64xf32>
    %cst = arith.constant 0.000000e+00 : f32
    %7 = vector.broadcast %cst : f32 to vector<24x64xf32>
    %8 = arith.maximumf %6, %7 : vector<24x64xf32>
    %9 = arith.truncf %8 : vector<24x64xf32> to vector<24x64xbf16>
    %c0_5 = arith.constant 0 : index
    %c0_6 = arith.constant 0 : index
    %10 = vector.load %arg4[%c0_5, %c0_6] : memref<64x1xbf16, #tpu.memory_space<vmem>>, vector<64x1xbf16>
    %cst_7 = arith.constant dense<0.000000e+00> : vector<24x1xf32>
    %11 = tpu.matmul %9, %10, %cst_7 {dimension_numbers = #tpu.dot_dimension_numbers<[1], [0], [0], [1], [0, 0, 1, 1], [], []>} : vector<24x64xbf16>, vector<64x1xbf16>, vector<24x1xf32> -> vector<24x1xf32>
    %c0_8 = arith.constant 0 : index
    %c0_9 = arith.constant 0 : index
    %12 = vector.load %arg5[%c0_8, %c0_9] : memref<1x1xf32, #tpu.memory_space<vmem>>, vector<1x1xf32>
    %13 = vector.broadcast %12 : vector<1x1xf32> to vector<24x1xf32>
    %14 = arith.addf %11, %13 : vector<24x1xf32>
    %c0_10 = arith.constant 0 : index
    %c0_11 = arith.constant 0 : index
    %15 = vector.load %arg6[%c0_10, %c0_11] : memref<24x1xf32, #tpu.memory_space<vmem>>, vector<24x1xf32>
    tpu.vector_store %arg6[%c0_10, %c0_11], %14 {strides = array<i32>} : memref<24x1xf32, #tpu.memory_space<vmem>>, vector<24x1xf32>,
    return
  }
  func.func @transform_0(%arg0: i32) -> (i32, i32) {
    %c0_i32 = arith.constant 0 : i32
    %c0_i32_0 = arith.constant 0 : i32
    return %arg0, %c0_i32 : i32, i32
  }
  func.func @transform_1(%arg0: i32) -> (i32, i32) {
    %c0_i32 = arith.constant 0 : i32
    %c0_i32_0 = arith.constant 0 : i32
    %c0_i32_1 = arith.constant 0 : i32
    return %c0_i32, %c0_i32_0 : i32, i32
  }
  func.func @transform_2(%arg0: i32) -> (i32, i32) {
    %c0_i32 = arith.constant 0 : i32
    %c0_i32_0 = arith.constant 0 : i32
    %c0_i32_1 = arith.constant 0 : i32
    return %c0_i32, %c0_i32_0 : i32, i32
  }
  func.func @transform_3(%arg0: i32) -> (i32, i32) {
    %c0_i32 = arith.constant 0 : i32
    %c0_i32_0 = arith.constant 0 : i32
    %c0_i32_1 = arith.constant 0 : i32
    return %c0_i32, %c0_i32_0 : i32, i32
  }
  func.func @transform_4(%arg0: i32) -> (i32, i32) {
    %c0_i32 = arith.constant 0 : i32
    %c0_i32_0 = arith.constant 0 : i32
    %c0_i32_1 = arith.constant 0 : i32
    return %c0_i32, %c0_i32_0 : i32, i32
  }
  func.func @transform_5(%arg0: i32) -> (i32, i32) {
    %c0_i32 = arith.constant 0 : i32
    %c0_i32_0 = arith.constant 0 : i32
    return %arg0, %c0_i32 : i32, i32
  }
}

</mosaic_0001>

<llo_original>
// kernel: outlayer_forward.5
$region0: #{outlayer_forward.5}
  #allocation0 [shape = 'u32[]', space=smem, size = 0x4, offset = 0x4, fixed_abs, tag = 'smem constant byte address 0x4 - core index']
  #allocation1 [shape = 'u32[72,128]{1,0:T(1,128)}', space=vmem, size = 0x9000, scoped, tag = 'internal scratch']
  %s0 = inlined_call_operand.vmem [shape: f32[24,64], index: 0, kind: input, shape index: {}]
  %s1 = inlined_call_operand.vmem [shape: f32[1,64], index: 1, kind: input, shape index: {}]
  %s2 = inlined_call_operand.vmem [shape: f32[1,64], index: 2, kind: input, shape index: {}]
  %s3 = inlined_call_operand.vmem [shape: bf16[24,64], index: 3, kind: output, shape index: {}]
  %s4 = sld [smem:[#allocation0]]
  $region22: #{outlayer_forward.5} parent=0
    _
  %s6 = ssub.s32 1, %s4
  %s7 = scalar_select 0, %s6, %s4
  // Predicated region
  $region2: #{outlayer_forward.5} parent=0 // pred_check
    _
  $region3: #{outlayer_forward.5} parent=0 // pred_check_branch
    %9 = sbr.rel (0) target = $region5
  $region4: #{outlayer_forward.5} parent=0 // pred_region
    _
  $region5: #{outlayer_forward.5} parent=0 // pred_fallthru
    _
  // Predicated region
  $region6: #{outlayer_forward.5} parent=0 // pred_check
    _
  $region7: #{outlayer_forward.5} parent=0 // pred_check_branch
    %11 = sbr.rel (0) target = $region9
  $region8: #{outlayer_forward.5} parent=0 // pred_region
    _
  $region9: #{outlayer_forward.5} parent=0 // pred_fallthru
    _
  // Predicated region
  $region10: #{outlayer_forward.5} parent=0 // pred_check
    _
  $region11: #{outlayer_forward.5} parent=0 // pred_check_branch
    %13 = sbr.rel (0) target = $region13
  $region12: #{outlayer_forward.5} parent=0 // pred_region
    _
  $region13: #{outlayer_forward.5} parent=0 // pred_fallthru
    _
  %v14 = vld [vmem:[%s0] sm:$0xff]
  %v15 = vld [vmem:[%s0 + $0x8] sm:$0xff]
  %v16 = vld [vmem:[%s0 + $0x10] sm:$0xff]
  %v17 = vld [vmem:[%s1] sm:$0x1]
  %v19 = vperm.slane %v17, 0
  %v21 = vmul.f32 %v14, %v19
  %v22 = vmul.f32 %v15, %v19
  %v23 = vmul.f32 %v16, %v19
  %v24 = vld [vmem:[%s2] sm:$0x1]
  %v26 = vperm.slane %v24, 0
  %v28 = vadd.f32 %v21, %v26
  %v29 = vadd.f32 %v22, %v26
  %v30 = vadd.f32 %v23, %v26
  %v31 = vmax.f32 %v28, 0.0
  %v32 = vmax.f32 %v29, 0.0
  %v33 = vmax.f32 %v30, 0.0
  %v34 = vpack.c.bf16 %v31, %v31
  %v35 = vpack.c.bf16 %v32, %v32
  %v36 = vpack.c.bf16 %v33, %v33
  %vm37 = vcmask 519168
  %38 = vst.msk [vmem:[%s3] sm:$0xf] %vm37, %v34
  %39 = vst.msk [vmem:[%s3 + $0x4] sm:$0xf] %vm37, %v35
  %40 = vst.msk [vmem:[%s3 + $0x8] sm:$0xf] %vm37, %v36
  // Predicated region
  $region14: #{outlayer_forward.5} parent=0 // pred_check
    _
  $region15: #{outlayer_forward.5} parent=0 // pred_check_branch
    %42 = sbr.rel (0) target = $region17
  $region16: #{outlayer_forward.5} parent=0 // pred_region
    _
  $region17: #{outlayer_forward.5} parent=0 // pred_fallthru
    _
  // Predicated region
  $region18: #{outlayer_forward.5} parent=0 // pred_check
    _
  $region19: #{outlayer_forward.5} parent=0 // pred_check_branch
    %44 = sbr.rel (0) target = $region21
  $region20: #{outlayer_forward.5} parent=0 // pred_region
    _
  $region21: #{outlayer_forward.5} parent=0 // pred_fallthru
    _

// kernel: outlayer_forward.4
$region0: #{outlayer_forward.4}
  #allocation0 [shape = 'u32[]', space=smem, size = 0x4, offset = 0x4, fixed_abs, tag = 'smem constant byte address 0x4 - core index']
  #allocation1 [shape = 'u32[72,128]{1,0:T(1,128)}', space=vmem, size = 0x9000, scoped, tag = 'internal scratch']
  %s0 = inlined_call_operand.vmem [shape: bf16[24,32], index: 0, kind: input, shape index: {}]
  %s1 = inlined_call_operand.vmem [shape: bf16[32,64], index: 1, kind: input, shape index: {}]
  %s2 = inlined_call_operand.vmem [shape: f32[1,64], index: 2, kind: input, shape index: {}]
  %s3 = inlined_call_operand.vmem [shape: f32[24,64], index: 3, kind: output, shape index: {0}]
  %s4 = inlined_call_operand.vmem [shape: f32[1,1,64], index: 4, kind: output, shape index: {1}]
  %s5 = inlined_call_operand.vmem [shape: f32[1,1,64], index: 5, kind: output, shape index: {2}]
  %6 = xla_tuple %s3, %s4, %s5
  %s7 = sld [smem:[#allocation0]]
  $region38: #{outlayer_forward.4} parent=0
    _
  %s9 = ssub.s32 1, %s7
  %s10 = scalar_select 0, %s9, %s7
  // Predicated region
  $region2: #{outlayer_forward.4} parent=0 // pred_check
    _
  $region3: #{outlayer_forward.4} parent=0 // pred_check_branch
    %12 = sbr.rel (0) target = $region5
  $region4: #{outlayer_forward.4} parent=0 // pred_region
    _
  $region5: #{outlayer_forward.4} parent=0 // pred_fallthru
    _
  // Predicated region
  $region6: #{outlayer_forward.4} parent=0 // pred_check
    _
  $region7: #{outlayer_forward.4} parent=0 // pred_check_branch
    %14 = sbr.rel (0) target = $region9
  $region8: #{outlayer_forward.4} parent=0 // pred_region
    _
  $region9: #{outlayer_forward.4} parent=0 // pred_fallthru
    _
  // Predicated region
  $region10: #{outlayer_forward.4} parent=0 // pred_check
    _
  $region11: #{outlayer_forward.4} parent=0 // pred_check_branch
    %16 = sbr.rel (0) target = $region13
  $region12: #{outlayer_forward.4} parent=0 // pred_region
    _
  $region13: #{outlayer_forward.4} parent=0 // pred_fallthru
    _
  %v18 = vld [vmem:[%s0] sm:$0xf]
  %v19 = vld [vmem:[%s0 + $0x4] sm:$0xf]
  %v20 = vld [vmem:[%s0 + $0x8] sm:$0xf]
  %v21 = vld [vmem:[%s1] sm:$0xf]
  %v22 = vld [vmem:[%s1 + $0x4] sm:$0xf]
  %v23 = vld [vmem:[%s1 + $0x8] sm:$0xf]
  %v24 = vld [vmem:[%s1 + $0xc] sm:$0xf]
  %v25 = vld [vmem:[%s2] sm:$0x1]
  %v27 = vperm.slane %v25, 0
  %v32 = vunpack.c.l.b16 %v18
  %v33 = vunpack.c.l.b16 %v19
  %v34 = vunpack.c.l.b16 %v20
  %v35 = vpack.c.b16 %v33, %v32
  %v36 = vpack.c.b16 %v34, %v34
  %v41 = vunpack.c.l.b16 %v21
  %v42 = vunpack.c.l.b16 %v22
  %v43 = vunpack.c.l.b16 %v23
  %v44 = vunpack.c.l.b16 %v24
  %v45 = vpack.c.b16 %v42, %v41
  %v46 = vpack.c.b16 %v44, %v43
  %vm49 = vcmask 261120
  %v51 = vsel %vm49, %v35, 0
  %v54 = vsel %vm49, %v36, 0
  %56 = vmatpush.bf16.msra.mxu0 0
  %57 = vmatpush.bf16.msra.mxu0 0
  %58 = vmatpush.bf16.msra.mxu0 0
  %59 = vmatpush.bf16.msra.mxu0 0
  %60 = vmatpush.bf16.msra.mxu0 0
  %61 = vmatpush.bf16.msra.mxu0 0
  %62 = vmatpush.bf16.msra.mxu0 %v46
  %63 = vmatpush.bf16.msra.mxu0 %v45
  %64 = vmatmul.bf16.gmra.mxu0 %v51
  %v65 = vpop.f32.mrf.mxu0
  %v66 = vadd.f32 %v27, %v65
  %v67 = vpop.f32.mrf.mxu0
  %v68 = vadd.f32 %v27, %v67
  %69 = vmatmul.bf16.gmra.mxu0 %v54
  %v70 = vpop.f32.mrf.mxu0
  %v71 = vadd.f32 %v27, %v70
  %v72 = vpop.f32.mrf.mxu0
  %73 = vdwg.mxu0
  %vm74 = vcmask 523264
  %75 = vst.msk [vmem:[%s3] sm:$0xff] %vm74, %v66
  %76 = vst.msk [vmem:[%s3 + $0x8] sm:$0xff] %vm74, %v68
  %77 = vst.msk [vmem:[%s3 + $0x10] sm:$0xff] %vm74, %v71
  %v78 = vlaneseq
  %v79 = vshrl.u32 %v78, 7
  %v80 = vadd.s32 %v79, 8
  %v81 = vadd.s32 %v79, 16
  %s82 = smul.u32 0, 24
  %v83 = vstv %s82
  %v84 = vadd.s32 %v79, %v83
  %v85 = vadd.s32 %v80, %v83
  %v86 = vadd.s32 %v81, %v83
  %vm87 = vcmp.lt.s32.totalorder %v84, 18
  %vm88 = vcmp.lt.s32.totalorder %v85, 18
  %vm89 = vcmp.lt.s32.totalorder %v86, 18
  %v90 = vsel %vm87, %v66, 0.0
  %v91 = vsel %vm88, %v68, 0.0
  %v92 = vsel %vm89, %v71, 0.0
  %v93 = vsel %vm74, %v90, 0.0
  %v94 = vsel %vm74, %v91, 0.0
  %v95 = vadd.f32 %v93, %v94
  %v96 = vsel %vm74, %v92, 0.0
  %v97 = vadd.f32 %v95, %v96
  %v98 = vrot.slane %v97, 4
  %v99 = vadd.f32 %v97, %v98
  %v100 = vrot.slane %v99, 2
  %v101 = vadd.f32 %v99, %v100
  %v102 = vrot.slane %v101, 1
  %v103 = vadd.f32 %v101, %v102
  %v104 = vmul.f32 %v90, %v90
  %v105 = vmul.f32 %v91, %v91
  %v106 = vmul.f32 %v92, %v92
  %v107 = vsel %vm74, %v104, 0.0
  %v108 = vsel %vm74, %v105, 0.0
  %v109 = vadd.f32 %v107, %v108
  %v110 = vsel %vm74, %v106, 0.0
  %v111 = vadd.f32 %v109, %v110
  %v112 = vrot.slane %v111, 4
  %v113 = vadd.f32 %v111, %v112
  %v114 = vrot.slane %v113, 2
  %v115 = vadd.f32 %v113, %v114
  %v116 = vrot.slane %v115, 1
  %v117 = vadd.f32 %v115, %v116
  %vm118 = vcmask 516096
  %119 = vst.msk [vmem:[%s4] sm:$0x1] %vm118, %v103
  %120 = vst.msk [vmem:[%s5] sm:$0x1] %vm118, %v117
  // Predicated region
  $region14: #{outlayer_forward.4} parent=0 // pred_check
    _
  $region15: #{outlayer_forward.4} parent=0 // pred_check_branch
    %122 = sbr.rel (0) target = $region17
  $region16: #{outlayer_forward.4} parent=0 // pred_region
    _
  $region17: #{outlayer_forward.4} parent=0 // pred_fallthru
    _
  // Predicated region
  $region18: #{outlayer_forward.4} parent=0 // pred_check
    _
  $region19: #{outlayer_forward.4} parent=0 // pred_check_branch
    %124 = sbr.rel (0) target = $region21
  $region20: #{outlayer_forward.4} parent=0 // pred_region
    _
  $region21: #{outlayer_forward.4} parent=0 // pred_fallthru
    _
  // Predicated region
  $region22: #{outlayer_forward.4} parent=0 // pred_check
    _
  $region23: #{outlayer_forward.4} parent=0 // pred_check_branch
    %126 = sbr.rel (0) target = $region25
  $region24: #{outlayer_forward.4} parent=0 // pred_region
    _
  $region25: #{outlayer_forward.4} parent=0 // pred_fallthru
    _
  // Predicated region
  $region26: #{outlayer_forward.4} parent=0 // pred_check
    _
  $region27: #{outlayer_forward.4} parent=0 // pred_check_branch
    %128 = sbr.rel (0) target = $region29
  $region28: #{outlayer_forward.4} parent=0 // pred_region
    _
  $region29: #{outlayer_forward.4} parent=0 // pred_fallthru
    _
  // Predicated region
  $region30: #{outlayer_forward.4} parent=0 // pred_check
    _
  $region31: #{outlayer_forward.4} parent=0 // pred_check_branch
    %130 = sbr.rel (0) target = $region33
  $region32: #{outlayer_forward.4} parent=0 // pred_region
    _
  $region33: #{outlayer_forward.4} parent=0 // pred_fallthru
    _
  // Predicated region
  $region34: #{outlayer_forward.4} parent=0 // pred_check
    _
  $region35: #{outlayer_forward.4} parent=0 // pred_check_branch
    %132 = sbr.rel (0) target = $region37
  $region36: #{outlayer_forward.4} parent=0 // pred_region
    _
  $region37: #{outlayer_forward.4} parent=0 // pred_fallthru
    _

// kernel: outlayer_forward.6
$region0: #{outlayer_forward.6}
  #allocation0 [shape = 'u32[]', space=smem, size = 0x4, offset = 0x4, fixed_abs, tag = 'smem constant byte address 0x4 - core index']
  #allocation1 [shape = 'u32[72,128]{1,0:T(1,128)}', space=vmem, size = 0x9000, scoped, tag = 'internal scratch']
  %s0 = inlined_call_operand.vmem [shape: bf16[24,64], index: 0, kind: input, shape index: {}]
  %s1 = inlined_call_operand.vmem [shape: bf16[64,64], index: 1, kind: input, shape index: {}]
  %s2 = inlined_call_operand.vmem [shape: f32[1,64], index: 2, kind: input, shape index: {}]
  %s3 = inlined_call_operand.vmem [shape: f32[24,64], index: 3, kind: output, shape index: {0}]
  %s4 = inlined_call_operand.vmem [shape: f32[1,1,64], index: 4, kind: output, shape index: {1}]
  %s5 = inlined_call_operand.vmem [shape: f32[1,1,64], index: 5, kind: output, shape index: {2}]
  %6 = xla_tuple %s3, %s4, %s5
  %s7 = sld [smem:[#allocation0]]
  $region38: #{outlayer_forward.6} parent=0
    _
  %s9 = ssub.s32 1, %s7
  %s10 = scalar_select 0, %s9, %s7
  // Predicated region
  $region2: #{outlayer_forward.6} parent=0 // pred_check
    _
  $region3: #{outlayer_forward.6} parent=0 // pred_check_branch
    %12 = sbr.rel (0) target = $region5
  $region4: #{outlayer_forward.6} parent=0 // pred_region
    _
  $region5: #{outlayer_forward.6} parent=0 // pred_fallthru
    _
  // Predicated region
  $region6: #{outlayer_forward.6} parent=0 // pred_check
    _
  $region7: #{outlayer_forward.6} parent=0 // pred_check_branch
    %14 = sbr.rel (0) target = $region9
  $region8: #{outlayer_forward.6} parent=0 // pred_region
    _
  $region9: #{outlayer_forward.6} parent=0 // pred_fallthru
    _
  // Predicated region
  $region10: #{outlayer_forward.6} parent=0 // pred_check
    _
  $region11: #{outlayer_forward.6} parent=0 // pred_check_branch
    %16 = sbr.rel (0) target = $region13
  $region12: #{outlayer_forward.6} parent=0 // pred_region
    _
  $region13: #{outlayer_forward.6} parent=0 // pred_fallthru
    _
  %v18 = vld [vmem:[%s0] sm:$0xf]
  %v19 = vld [vmem:[%s0 + $0x4] sm:$0xf]
  %v20 = vld [vmem:[%s0 + $0x8] sm:$0xf]
  %v21 = vld [vmem:[%s1] sm:$0xf]
  %v22 = vld [vmem:[%s1 + $0x4] sm:$0xf]
  %v23 = vld [vmem:[%s1 + $0x8] sm:$0xf]
  %v24 = vld [vmem:[%s1 + $0xc] sm:$0xf]
  %v25 = vld [vmem:[%s1 + $0x10] sm:$0xf]
  %v26 = vld [vmem:[%s1 + $0x14] sm:$0xf]
  %v27 = vld [vmem:[%s1 + $0x18] sm:$0xf]
  %v28 = vld [vmem:[%s1 + $0x1c] sm:$0xf]
  %v29 = vld [vmem:[%s2] sm:$0x1]
  %v31 = vperm.slane %v29, 0
  %v36 = vunpack.c.l.b16 %v18
  %v37 = vunpack.c.l.b16 %v19
  %v38 = vunpack.c.l.b16 %v20
  %v39 = vpack.c.b16 %v37, %v36
  %v40 = vpack.c.b16 %v38, %v38
  %v49 = vunpack.c.l.b16 %v21
  %v50 = vunpack.c.l.b16 %v22
  %v51 = vunpack.c.l.b16 %v23
  %v52 = vunpack.c.l.b16 %v24
  %v53 = vunpack.c.l.b16 %v25
  %v54 = vunpack.c.l.b16 %v26
  %v55 = vunpack.c.l.b16 %v27
  %v56 = vunpack.c.l.b16 %v28
  %v57 = vpack.c.b16 %v50, %v49
  %v58 = vpack.c.b16 %v52, %v51
  %v59 = vpack.c.b16 %v54, %v53
  %v60 = vpack.c.b16 %v56, %v55
  %vm65 = vcmask 523264
  %v67 = vsel %vm65, %v39, 0
  %v70 = vsel %vm65, %v40, 0
  %72 = vmatpush.bf16.msra.mxu0 0
  %73 = vmatpush.bf16.msra.mxu0 0
  %74 = vmatpush.bf16.msra.mxu0 0
  %75 = vmatpush.bf16.msra.mxu0 0
  %76 = vmatpush.bf16.msra.mxu0 %v60
  %77 = vmatpush.bf16.msra.mxu0 %v59
  %78 = vmatpush.bf16.msra.mxu0 %v58
  %79 = vmatpush.bf16.msra.mxu0 %v57
  %80 = vmatmul.bf16.gmra.mxu0 %v67
  %v81 = vpop.f32.mrf.mxu0
  %v82 = vadd.f32 %v31, %v81
  %v83 = vpop.f32.mrf.mxu0
  %v84 = vadd.f32 %v31, %v83
  %85 = vmatmul.bf16.gmra.mxu0 %v70
  %v86 = vpop.f32.mrf.mxu0
  %v87 = vadd.f32 %v31, %v86
  %v88 = vpop.f32.mrf.mxu0
  %89 = vdwg.mxu0
  %90 = vst.msk [vmem:[%s3] sm:$0xff] %vm65, %v82
  %91 = vst.msk [vmem:[%s3 + $0x8] sm:$0xff] %vm65, %v84
  %92 = vst.msk [vmem:[%s3 + $0x10] sm:$0xff] %vm65, %v87
  %v93 = vlaneseq
  %v94 = vshrl.u32 %v93, 7
  %v95 = vadd.s32 %v94, 8
  %v96 = vadd.s32 %v94, 16
  %s97 = smul.u32 0, 24
  %v98 = vstv %s97
  %v99 = vadd.s32 %v94, %v98
  %v100 = vadd.s32 %v95, %v98
  %v101 = vadd.s32 %v96, %v98
  %vm102 = vcmp.lt.s32.totalorder %v99, 18
  %vm103 = vcmp.lt.s32.totalorder %v100, 18
  %vm104 = vcmp.lt.s32.totalorder %v101, 18
  %v105 = vsel %vm102, %v82, 0.0
  %v106 = vsel %vm103, %v84, 0.0
  %v107 = vsel %vm104, %v87, 0.0
  %v108 = vsel %vm65, %v105, 0.0
  %v109 = vsel %vm65, %v106, 0.0
  %v110 = vadd.f32 %v108, %v109
  %v111 = vsel %vm65, %v107, 0.0
  %v112 = vadd.f32 %v110, %v111
  %v113 = vrot.slane %v112, 4
  %v114 = vadd.f32 %v112, %v113
  %v115 = vrot.slane %v114, 2
  %v116 = vadd.f32 %v114, %v115
  %v117 = vrot.slane %v116, 1
  %v118 = vadd.f32 %v116, %v117
  %v119 = vmul.f32 %v105, %v105
  %v120 = vmul.f32 %v106, %v106
  %v121 = vmul.f32 %v107, %v107
  %v122 = vsel %vm65, %v119, 0.0
  %v123 = vsel %vm65, %v120, 0.0
  %v124 = vadd.f32 %v122, %v123
  %v125 = vsel %vm65, %v121, 0.0
  %v126 = vadd.f32 %v124, %v125
  %v127 = vrot.slane %v126, 4
  %v128 = vadd.f32 %v126, %v127
  %v129 = vrot.slane %v128, 2
  %v130 = vadd.f32 %v128, %v129
  %v131 = vrot.slane %v130, 1
  %v132 = vadd.f32 %v130, %v131
  %vm133 = vcmask 516096
  %134 = vst.msk [vmem:[%s4] sm:$0x1] %vm133, %v118
  %135 = vst.msk [vmem:[%s5] sm:$0x1] %vm133, %v132
  // Predicated region
  $region14: #{outlayer_forward.6} parent=0 // pred_check
    _
  $region15: #{outlayer_forward.6} parent=0 // pred_check_branch
    %137 = sbr.rel (0) target = $region17
  $region16: #{outlayer_forward.6} parent=0 // pred_region
    _
  $region17: #{outlayer_forward.6} parent=0 // pred_fallthru
    _
  // Predicated region
  $region18: #{outlayer_forward.6} parent=0 // pred_check
    _
  $region19: #{outlayer_forward.6} parent=0 // pred_check_branch
    %139 = sbr.rel (0) target = $region21
  $region20: #{outlayer_forward.6} parent=0 // pred_region
    _
  $region21: #{outlayer_forward.6} parent=0 // pred_fallthru
    _
  // Predicated region
  $region22: #{outlayer_forward.6} parent=0 // pred_check
    _
  $region23: #{outlayer_forward.6} parent=0 // pred_check_branch
    %141 = sbr.rel (0) target = $region25
  $region24: #{outlayer_forward.6} parent=0 // pred_region
    _
  $region25: #{outlayer_forward.6} parent=0 // pred_fallthru
    _
  // Predicated region
  $region26: #{outlayer_forward.6} parent=0 // pred_check
    _
  $region27: #{outlayer_forward.6} parent=0 // pred_check_branch
    %143 = sbr.rel (0) target = $region29
  $region28: #{outlayer_forward.6} parent=0 // pred_region
    _
  $region29: #{outlayer_forward.6} parent=0 // pred_fallthru
    _
  // Predicated region
  $region30: #{outlayer_forward.6} parent=0 // pred_check
    _
  $region31: #{outlayer_forward.6} parent=0 // pred_check_branch
    %145 = sbr.rel (0) target = $region33
  $region32: #{outlayer_forward.6} parent=0 // pred_region
    _
  $region33: #{outlayer_forward.6} parent=0 // pred_fallthru
    _
  // Predicated region
  $region34: #{outlayer_forward.6} parent=0 // pred_check
    _
  $region35: #{outlayer_forward.6} parent=0 // pred_check_branch
    %147 = sbr.rel (0) target = $region37
  $region36: #{outlayer_forward.6} parent=0 // pred_region
    _
  $region37: #{outlayer_forward.6} parent=0 // pred_fallthru
    _

// kernel: outlayer_forward.7
$region0: #{outlayer_forward.7}
  #allocation0 [shape = 'u32[]', space=smem, size = 0x4, offset = 0x4, fixed_abs, tag = 'smem constant byte address 0x4 - core index']
  #allocation1 [shape = 'u32[72,128]{1,0:T(1,128)}', space=vmem, size = 0x9000, scoped, tag = 'internal scratch']
  #allocation2 [shape = 'f32[1,1]{1,0:T(1,128)S(1)}', space=vmem, size = 0x200, scoped, tag = 'scoped memory for outlayer_forward.7']
  %s0 = inlined_call_operand.vmem [shape: f32[24,64], index: 0, kind: input, shape index: {}]
  %s1 = inlined_call_operand.vmem [shape: f32[1,64], index: 1, kind: input, shape index: {}]
  %s2 = inlined_call_operand.vmem [shape: f32[1,64], index: 2, kind: input, shape index: {}]
  %s3 = inlined_call_operand.vmem [shape: bf16[64,1], index: 3, kind: input, shape index: {}]
  %s4 = inlined_call_operand.<no memory space> [shape: f32[1,1], index: 4, kind: input, shape index: {}]
  %s5 = inlined_call_operand.vmem [shape: f32[24,1], index: 5, kind: output, shape index: {}]
  %s6 = sld [smem:[#allocation0]]
  $region30: #{outlayer_forward.7} parent=0
    _
  %s8 = ssub.s32 1, %s6
  %s9 = scalar_select 0, %s8, %s6
  %v10 = vstv %s4
  %11 = vst [vmem:[#allocation2] sm:$0x1] %v10
  // Predicated region
  $region2: #{outlayer_forward.7} parent=0 // pred_check
    _
  $region3: #{outlayer_forward.7} parent=0 // pred_check_branch
    %13 = sbr.rel (0) target = $region5
  $region4: #{outlayer_forward.7} parent=0 // pred_region
    _
  $region5: #{outlayer_forward.7} parent=0 // pred_fallthru
    _
  // Predicated region
  $region6: #{outlayer_forward.7} parent=0 // pred_check
    _
  $region7: #{outlayer_forward.7} parent=0 // pred_check_branch
    %15 = sbr.rel (0) target = $region9
  $region8: #{outlayer_forward.7} parent=0 // pred_region
    _
  $region9: #{outlayer_forward.7} parent=0 // pred_fallthru
    _
  // Predicated region
  $region10: #{outlayer_forward.7} parent=0 // pred_check
    _
  $region11: #{outlayer_forward.7} parent=0 // pred_check_branch
    %17 = sbr.rel (0) target = $region13
  $region12: #{outlayer_forward.7} parent=0 // pred_region
    _
  $region13: #{outlayer_forward.7} parent=0 // pred_fallthru
    _
  // Predicated region
  $region14: #{outlayer_forward.7} parent=0 // pred_check
    _
  $region15: #{outlayer_forward.7} parent=0 // pred_check_branch
    %19 = sbr.rel (0) target = $region17
  $region16: #{outlayer_forward.7} parent=0 // pred_region
    _
  $region17: #{outlayer_forward.7} parent=0 // pred_fallthru
    _
  // Predicated region
  $region18: #{outlayer_forward.7} parent=0 // pred_check
    _
  $region19: #{outlayer_forward.7} parent=0 // pred_check_branch
    %21 = sbr.rel (0) target = $region21
  $region20: #{outlayer_forward.7} parent=0 // pred_region
    _
  $region21: #{outlayer_forward.7} parent=0 // pred_fallthru
    _
  %v23 = vld [vmem:[%s0] sm:$0xff]
  %v24 = vld [vmem:[%s0 + $0x8] sm:$0xff]
  %v25 = vld [vmem:[%s0 + $0x10] sm:$0xff]
  %v26 = vld [vmem:[%s1] sm:$0x1]
  %v28 = vperm.slane %v26, 0
  %v30 = vmul.f32 %v23, %v28
  %v31 = vmul.f32 %v24, %v28
  %v32 = vmul.f32 %v25, %v28
  %v33 = vld [vmem:[%s2] sm:$0x1]
  %v35 = vperm.slane %v33, 0
  %v37 = vadd.f32 %v30, %v35
  %v38 = vadd.f32 %v31, %v35
  %v39 = vadd.f32 %v32, %v35
  %v40 = vmax.f32 %v37, 0.0
  %v41 = vmax.f32 %v38, 0.0
  %v42 = vmax.f32 %v39, 0.0
  %v43 = vpack.c.bf16 %v41, %v40
  %v44 = vpack.c.bf16 %v42, %v42
  %v45 = vld [vmem:[%s3] sm:$0xf]
  %v46 = vld [vmem:[%s3 + $0x4] sm:$0xf]
  %v47 = vld [vmem:[%s3 + $0x8] sm:$0xf]
  %v48 = vld [vmem:[%s3 + $0xc] sm:$0xf]
  %v49 = vld [vmem:[%s3 + $0x10] sm:$0xf]
  %v50 = vld [vmem:[%s3 + $0x14] sm:$0xf]
  %v51 = vld [vmem:[%s3 + $0x18] sm:$0xf]
  %v52 = vld [vmem:[%s3 + $0x1c] sm:$0xf]
  %v53 = vld [vmem:[#allocation2] sm:$0x1]
  %v55 = vperm.slane %v53, 0
  %v65 = vunpack.c.l.b16 %v45
  %v66 = vunpack.c.l.b16 %v46
  %v67 = vunpack.c.l.b16 %v47
  %v68 = vunpack.c.l.b16 %v48
  %v69 = vunpack.c.l.b16 %v49
  %v70 = vunpack.c.l.b16 %v50
  %v71 = vunpack.c.l.b16 %v51
  %v72 = vunpack.c.l.b16 %v52
  %v73 = vpack.c.b16 %v66, %v65
  %v74 = vpack.c.b16 %v68, %v67
  %v75 = vpack.c.b16 %v70, %v69
  %v76 = vpack.c.b16 %v72, %v71
  %vm81 = vcmask 523264
  %v83 = vsel %vm81, %v43, 0
  %v86 = vsel %vm81, %v44, 0
  %88 = vmatpush.bf16.msra.mxu0 0
  %89 = vmatpush.bf16.msra.mxu0 0
  %90 = vmatpush.bf16.msra.mxu0 0
  %91 = vmatpush.bf16.msra.mxu0 0
  %92 = vmatpush.bf16.msra.mxu0 %v76
  %93 = vmatpush.bf16.msra.mxu0 %v75
  %94 = vmatpush.bf16.msra.mxu0 %v74
  %95 = vmatpush.bf16.msra.mxu0 %v73
  %96 = vmatmul.bf16.gmra.mxu0 %v83
  %v97 = vpop.f32.mrf.mxu0
  %v98 = vadd.f32 %v55, %v97
  %v99 = vpop.f32.mrf.mxu0
  %v100 = vadd.f32 %v55, %v99
  %101 = vmatmul.bf16.gmra.mxu0 %v86
  %v102 = vpop.f32.mrf.mxu0
  %v103 = vadd.f32 %v55, %v102
  %v104 = vpop.f32.mrf.mxu0
  %105 = vdwg.mxu0
  %vm106 = vcmask 7168
  %107 = vst.msk [vmem:[%s5] sm:$0xff] %vm106, %v98
  %108 = vst.msk [vmem:[%s5 + $0x8] sm:$0xff] %vm106, %v100
  %109 = vst.msk [vmem:[%s5 + $0x10] sm:$0xff] %vm106, %v103
  // Predicated region
  $region22: #{outlayer_forward.7} parent=0 // pred_check
    _
  $region23: #{outlayer_forward.7} parent=0 // pred_check_branch
    %111 = sbr.rel (0) target = $region25
  $region24: #{outlayer_forward.7} parent=0 // pred_region
    _
  $region25: #{outlayer_forward.7} parent=0 // pred_fallthru
    _
  // Predicated region
  $region26: #{outlayer_forward.7} parent=0 // pred_check
    _
  $region27: #{outlayer_forward.7} parent=0 // pred_check_branch
    %113 = sbr.rel (0) target = $region29
  $region28: #{outlayer_forward.7} parent=0 // pred_region
    _
  $region29: #{outlayer_forward.7} parent=0 // pred_fallthru
    _

</llo_original>
